<compile_context>
chip_gen: v7x
topology: tpu7x:2x2x1
jax: 0.10.0
libtpu: 0.0.40
codegen_flags: <defaults>
</compile_context>

<pallas_src>
import functools

import jax
import jax.numpy as jnp
from jax import lax
from jax.experimental import pallas as pl
from jax.experimental.pallas import tpu as pltpu


def _round_up(x, m):
    return (x + m - 1) // m * m


# ---------------------------------------------------------------------------
# Kernel helpers
# ---------------------------------------------------------------------------

def _fused_row_losses(a, c_t, pos_f, not_self, inv_temp, loss_scale):
    """Fused SupCon per-anchor-row loss for one tile.  Returns [tm, 1] f32.

    mean_log_prob_pos = (sum(pos*s) - den*(row_max + log(sum_exp))) / den
    """
    # Canonical [M,K] x [K,N] MXU matmul, f32 accumulation (operands may be bf16).
    s = jnp.dot(a, c_t, preferred_element_type=jnp.float32)           # [tm, Nc]
    s = s * inv_temp                                                   # f32 scale post-matmul
    row_max = jnp.max(s, axis=-1, keepdims=True)                       # [tm, 1]
    sum_exp = jnp.sum(jnp.where(not_self, jnp.exp(s - row_max), 0.0),
                      axis=-1, keepdims=True)                          # [tm, 1]
    lse = row_max + jnp.log(sum_exp)                                   # [tm, 1]
    num = jnp.sum(pos_f * s, axis=-1, keepdims=True)                   # [tm, 1]
    den = jnp.sum(pos_f, axis=-1, keepdims=True)                       # [tm, 1]
    # Rows with zero positives yield 0 * inf = NaN, matching the PyTorch 0/0.
    return (num - den * lse) * (pl.reciprocal(den, approx=False) * (-loss_scale))


def _tile_masks(tm, nc):
    """Row ids [tm,1] and the not-self mask [tm,nc] for the current row tile."""
    row0 = pl.program_id(0) * tm
    row_ids = lax.broadcasted_iota(jnp.int32, (tm, 1), 0) + row0       # [tm, 1]
    col_ids = lax.broadcasted_iota(jnp.int32, (1, nc), 1)              # [1, nc]
    return row_ids, row_ids != col_ids


def _write_partial(out_ref, loss_rows, row_ids, num_valid_rows):
    """Zero padded rows, reduce the tile to one partial sum, store lane-dense."""
    valid = row_ids < num_valid_rows                                    # [tm, 1]
    partial = jnp.sum(jnp.where(valid, loss_rows, 0.0), axis=0, keepdims=True)
    out_ref[...] = jnp.broadcast_to(partial, out_ref.shape).astype(out_ref.dtype)


def _supcon_labels_kernel(a_lab_ref, c_lab_ref, a_ref, ct_ref, out_ref, *,
                          inv_temp, loss_scale, num_valid_rows):
    tm = a_ref.shape[0]
    nc = ct_ref.shape[1]
    row_ids, not_self = _tile_masks(tm, nc)
    # positives = same label AND not the anchor's own view.
    pos_f = jnp.logical_and(a_lab_ref[...] == c_lab_ref[...],
                            not_self).astype(jnp.float32)
    loss_rows = _fused_row_losses(a_ref[...], ct_ref[...], pos_f, not_self,
                                  inv_temp, loss_scale)
    _write_partial(out_ref, loss_rows, row_ids, num_valid_rows)


def _supcon_mask_kernel(mask_ref, a_ref, ct_ref, out_ref, *,
                        inv_temp, loss_scale, num_valid_rows):
    tm = a_ref.shape[0]
    nc = ct_ref.shape[1]
    row_ids, not_self = _tile_masks(tm, nc)
    pos_f = jnp.where(not_self, mask_ref[...].astype(jnp.float32), 0.0)
    loss_rows = _fused_row_losses(a_ref[...], ct_ref[...], pos_f, not_self,
                                  inv_temp, loss_scale)
    _write_partial(out_ref, loss_rows, row_ids, num_valid_rows)


# ---------------------------------------------------------------------------
# VMEM budgeting
# ---------------------------------------------------------------------------

def _vmem_capacity_bytes():
    try:
        return int(pltpu.get_tpu_info().vmem_capacity_bytes)
    except Exception:
        return 64 << 20   # conservative: v7x per-TensorCore VMEM


def _pick_block_rows(na, nc, dim, feat_bytes, mask_stream_bytes, row_align,
                     vmem_budget):
    """Largest row tile whose full live set fits the VMEM budget."""
    na_aligned = _round_up(max(na, 1), row_align)
    lane_dim = _round_up(dim, 128)
    # Resident (single-buffered) contrast block + contrast labels.
    resident = nc * dim * feat_bytes + _round_up(nc, 128) * 4

    def usage(tm):
        return (resident
                + 2 * tm * lane_dim * feat_bytes      # anchor tile, double-buffered
                + 2 * tm * 128 * 4                    # (tm,1) i32 labels pad to 128 lanes
                + 5 * tm * nc * 4                     # live f32 [tm, nc] temporaries
                + 2 * tm * nc * mask_stream_bytes)    # streamed mask, double-buffered

    for cand in (2048, 1024, 512, 256, 128, 64, 32, 16, 8):
        if cand % row_align:
            continue
        cand = min(cand, na_aligned)
        if usage(cand) <= vmem_budget:
            return cand
    return row_align


# ---------------------------------------------------------------------------
# Wrapper
# ---------------------------------------------------------------------------

def supcon_loss(features, labels=None, mask=None, *,
                temperature=0.07, contrast_mode='all', base_temperature=0.07,
                block_rows=None, matmul_dtype=jnp.bfloat16):
    """JAX/Pallas port of SupConLoss.forward.  Returns a scalar f32 loss."""
    if features.ndim < 3:
        raise ValueError('`features` needs to be [bsz, n_views, ...]')
    if features.ndim > 3:
        features = features.reshape(features.shape[0], features.shape[1], -1)
    bsz, n_views, dim = features.shape
    if labels is not None and mask is not None:
        raise ValueError('Cannot define both `labels` and `mask`')

    # View-major contrast rows (== torch.cat(torch.unbind(features, 1), 0)).
    contrast_feature = jnp.swapaxes(features, 0, 1).reshape(n_views * bsz, dim)
    if contrast_mode == 'one':
        anchor_feature = features[:, 0, :]
        anchor_count = 1
    elif contrast_mode == 'all':
        anchor_feature = contrast_feature
        anchor_count = n_views
    else:
        raise ValueError('Unknown mode: {}'.format(contrast_mode))

    Na = anchor_count * bsz
    Nc = n_views * bsz

    use_mask_path = mask is not None
    # int8-streamed mask tiles want 32-row granularity; otherwise 8 rows (f32 sublane).
    row_align = 32 if use_mask_path else 8
    feat_bytes = jnp.dtype(matmul_dtype).itemsize
    mask_stream_bytes = 1 if use_mask_path else 0

    vmem_cap = _vmem_capacity_bytes()
    vmem_budget = int(vmem_cap * 0.65)
    vmem_limit = int(min(max(vmem_cap * 0.8, 32 << 20), 100 << 20))

    if block_rows is None:
        tm = _pick_block_rows(Na, Nc, dim, feat_bytes, mask_stream_bytes,
                              row_align, vmem_budget)
    else:
        tm = max(row_align,
                 _round_up(min(block_rows, _round_up(Na, row_align)), row_align))
    na_pad = _round_up(Na, tm)
    grid_m = na_pad // tm
    pad_rows = na_pad - Na

    # MXU operands: bf16 by default (f32 accumulation in-kernel).  Contrast is
    # pre-transposed once here so the kernel does a plain [tm,D] @ [D,Nc].
    anchor_op = anchor_feature.astype(matmul_dtype)
    if pad_rows:
        anchor_op = jnp.pad(anchor_op, ((0, pad_rows), (0, 0)))
    contrast_t = contrast_feature.astype(matmul_dtype).T                # [dim, Nc]

    inv_temp = 1.0 / float(temperature)
    loss_scale = float(temperature) / float(base_temperature)

    out_shape = jax.ShapeDtypeStruct((8, grid_m * 128), jnp.float32)
    out_spec = pl.BlockSpec((8, 128), lambda i: (0, i))
    cparams = pltpu.CompilerParams(dimension_semantics=("parallel",),
                                   vmem_limit_bytes=vmem_limit)

    if not use_mask_path:
        if labels is None:
            base_labels = jnp.arange(bsz, dtype=jnp.int32)              # SimCLR
        else:
            labels = jnp.asarray(labels).reshape(-1)
            if labels.shape[0] != bsz:
                raise ValueError('Num of labels does not match num of features')
            base_labels = labels.astype(jnp.int32)
        contrast_labels = jnp.tile(base_labels, n_views).reshape(1, Nc)
        if anchor_count == 1:
            anchor_labels = base_labels
        else:
            anchor_labels = jnp.tile(base_labels, anchor_count)
        anchor_labels = jnp.pad(anchor_labels, (0, pad_rows),
                                constant_values=-1).reshape(na_pad, 1)

        kernel = functools.partial(_supcon_labels_kernel, inv_temp=inv_temp,
                                   loss_scale=loss_scale, num_valid_rows=Na)
        operands = (anchor_labels, contrast_labels, anchor_op, contrast_t)

        def build_specs(resident_spec):
            return [
                pl.BlockSpec((tm, 1), lambda i: (i, 0)),       # anchor labels (streamed)
                resident_spec((1, Nc), lambda i: (0, 0)),      # contrast labels (resident)
                pl.BlockSpec((tm, dim), lambda i: (i, 0)),     # anchor tile (streamed)
                resident_spec((dim, Nc), lambda i: (0, 0)),    # contrast^T (resident)
            ]
    else:
        # Explicit (possibly asymmetric) user mask, streamed as int8 (the
        # reference mask is binary).  Self-exclusion is still built in-kernel.
        # TODO(synk): keep only the [bsz, bsz] base mask resident and rebuild the
        # [tm, Nc] tile in-kernel with modular indexing if this path gets hot.
        base_mask = jnp.asarray(mask)
        mask_full = jnp.tile(base_mask, (anchor_count, n_views)).astype(jnp.int8)
        if pad_rows:
            mask_full = jnp.pad(mask_full, ((0, pad_rows), (0, 0)))

        kernel = functools.partial(_supcon_mask_kernel, inv_temp=inv_temp,
                                   loss_scale=loss_scale, num_valid_rows=Na)
        operands = (mask_full, anchor_op, contrast_t)

        def build_specs(resident_spec):
            return [
                pl.BlockSpec((tm, Nc), lambda i: (i, 0)),      # int8 mask tile (streamed)
                pl.BlockSpec((tm, dim), lambda i: (i, 0)),     # anchor tile (streamed)
                resident_spec((dim, Nc), lambda i: (0, 0)),    # contrast^T (resident)
            ]

    def run(single_buffer_resident):
        if single_buffer_resident:
            def resident_spec(shape, imap):
                return pl.BlockSpec(shape, imap, pipeline_mode=pl.Buffered(1))
        else:
            resident_spec = pl.BlockSpec
        return pl.pallas_call(
            kernel,
            out_shape=out_shape,
            grid=(grid_m,),
            in_specs=build_specs(resident_spec),
            out_specs=out_spec,
            compiler_params=cparams,
        )(*operands)

    try:
        out = run(True)      # single-buffered resident contrast (preferred)
    except Exception:        # older JAX without pipeline_mode support
        out = run(False)

    # TODO(synk): for Nc*D that no longer fits VMEM (esp. v7x 64 MiB), add a
    # second "arbitrary" grid axis over the contrast dim with an online-softmax
    # accumulator instead of the fully-resident contrast block.

    # Per-tile partial sums live in column 0 of each (8,128) output block.
    partials = out[0, :].reshape(grid_m, 128)[:, 0]
    # loss.view(anchor_count, batch_size).mean() == mean over all anchor rows.
    return jnp.sum(partials) / Na


# ---------------------------------------------------------------------------
# Pure-JAX reference (mirrors the PyTorch code) for correctness checking
# ---------------------------------------------------------------------------

def _supcon_loss_ref(features, labels=None, mask=None, *,
                     temperature=0.07, contrast_mode='all', base_temperature=0.07):
    if features.ndim > 3:
        features = features.reshape(features.shape[0], features.shape[1], -1)
    bsz, n_views = features.shape[0], features.shape[1]
    if labels is None and mask is None:
        mask = jnp.eye(bsz, dtype=jnp.float32)
    elif labels is not None:
        labels = labels.reshape(-1, 1)
        mask = (labels == labels.T).astype(jnp.float32)
    else:
        mask = mask.astype(jnp.float32)
    contrast_feature = jnp.concatenate([features[:, v, :] for v in range(n_views)], axis=0)
    if contrast_mode == 'one':
        anchor_feature, anchor_count = features[:, 0, :], 1
    else:
        anchor_feature, anchor_count = contrast_feature, n_views
    adc = jnp.matmul(anchor_feature, contrast_feature.T) / temperature
    logits = adc - jnp.max(adc, axis=1, keepdims=True)
    mask = jnp.tile(mask, (anchor_count, n_views))
    Na, Nc = mask.shape
    logits_mask = 1.0 - jnp.eye(Na, Nc, dtype=jnp.float32)
    mask = mask * logits_mask
    exp_logits = jnp.exp(logits) * logits_mask
    log_prob = logits - jnp.log(exp_logits.sum(1, keepdims=True))
    mean_log_prob_pos = (mask * log_prob).sum(1) / mask.sum(1)
    loss = -(temperature / base_temperature) * mean_log_prob_pos
    return loss.reshape(anchor_count, bsz).mean()


if __name__ == "__main__":
    key = jax.random.PRNGKey(0)
    k1, k2 = jax.random.split(key)

    bsz, n_views, dim = 4, 2, 32
    feats = jax.random.normal(k1, (bsz, n_views, dim), dtype=jnp.float32)
    feats = feats / jnp.linalg.norm(feats, axis=-1, keepdims=True)
    labels = jnp.array([0, 1, 0, 1], dtype=jnp.int32)
    m = (labels.reshape(-1, 1) == labels.reshape(1, -1)).astype(jnp.float32)

    bsz2 = 6
    feats2 = jax.random.normal(k2, (bsz2, n_views, dim), dtype=jnp.float32)
    feats2 = feats2 / jnp.linalg.norm(feats2, axis=-1, keepdims=True)
    labels2 = jnp.array([0, 1, 2, 0, 1, 2], dtype=jnp.int32)

    checks = []
    # f32 MXU operands: tight tolerance against the pure-JAX reference.
    checks.append((supcon_loss(feats, labels=labels, matmul_dtype=jnp.float32),
                   _supcon_loss_ref(feats, labels=labels), 1e-4, 1e-5))
    # bf16 MXU operands (default): looser tolerance.
    checks.append((supcon_loss(feats, labels=labels),
                   _supcon_loss_ref(feats, labels=labels), 5e-2, 5e-2))
    # Unsupervised (SimCLR): labels=None, mask=None.
    checks.append((supcon_loss(feats), _supcon_loss_ref(feats), 5e-2, 5e-2))
    # Explicit mask path (int8-streamed mask, 32-row tiles, 24 padded rows).
    checks.append((supcon_loss(feats, mask=m), _supcon_loss_ref(feats, mask=m),
                   5e-2, 5e-2))
    # contrast_mode='one' (exercises anchor-row padding: Na=4 -> tile of 8).
    checks.append((supcon_loss(feats, labels=labels, contrast_mode='one'),
                   _supcon_loss_ref(feats, labels=labels, contrast_mode='one'),
                   5e-2, 5e-2))
    # Multi-tile path: Na=12, forced 8-row tiles -> 2 grid steps + padded rows.
    checks.append((supcon_loss(feats2, labels=labels2, block_rows=8),
                   _supcon_loss_ref(feats2, labels=labels2), 5e-2, 5e-2))

    for got, want, rtol, atol in checks:
        got = jax.block_until_ready(got)
        assert jnp.allclose(got, want, rtol=rtol, atol=atol), (got, want)

    print("KERNEL_OK")
</pallas_src>

<mosaic_0001>
module attributes {stable_mosaic.version = 11 : i64} {
  func.func @_supcon_labels_kernel(%arg0: i32, %arg1: memref<8x1xi32, #tpu.memory_space<vmem>>, %arg2: memref<1x8xi32, #tpu.memory_space<vmem>>, %arg3: memref<8x32xf32, #tpu.memory_space<vmem>>, %arg4: memref<32x8xf32, #tpu.memory_space<vmem>>, %arg5: memref<8x128xf32, #tpu.memory_space<vmem>>) attributes {dimension_semantics = [#tpu.dimension_semantics<parallel>], iteration_bounds = array<i64: 1>, scalar_prefetch = 0 : i64, scratch_operands = 0 : i64, tpu.core_type = #tpu.core_type<tc>, window_params = [{transform_indices = @transform_0, window_bounds = array<i64: 8, 1>}, {pipeline_mode = #tpu.pipeline_mode<synchronous>, transform_indices = @transform_1, window_bounds = array<i64: 1, 8>}, {transform_indices = @transform_2, window_bounds = array<i64: 8, 32>}, {pipeline_mode = #tpu.pipeline_mode<synchronous>, transform_indices = @transform_3, window_bounds = array<i64: 32, 8>}, {transform_indices = @transform_4, window_bounds = array<i64: 8, 128>}]} {
    %c8_i32 = arith.constant 8 : i32
    %0 = arith.muli %arg0, %c8_i32 : i32
    %1 = tpu.iota {dimensions = array<i32: 0>} : vector<8x1xi32>
    %2 = vector.broadcast %0 : i32 to vector<8x1xi32>
    %3 = arith.addi %1, %2 : vector<8x1xi32>
    %4 = tpu.iota {dimensions = array<i32: 1>} : vector<1x8xi32>
    %5 = vector.broadcast %3 : vector<8x1xi32> to vector<8x8xi32>
    %6 = vector.broadcast %4 : vector<1x8xi32> to vector<8x8xi32>
    %7 = arith.cmpi ne, %5, %6 : vector<8x8xi32>
    %c0 = arith.constant 0 : index
    %c0_0 = arith.constant 0 : index
    %8 = vector.load %arg1[%c0, %c0_0] : memref<8x1xi32, #tpu.memory_space<vmem>>, vector<8x1xi32>
    %c0_1 = arith.constant 0 : index
    %c0_2 = arith.constant 0 : index
    %9 = vector.load %arg2[%c0_1, %c0_2] : memref<1x8xi32, #tpu.memory_space<vmem>>, vector<1x8xi32>
    %10 = vector.broadcast %8 : vector<8x1xi32> to vector<8x8xi32>
    %11 = vector.broadcast %9 : vector<1x8xi32> to vector<8x8xi32>
    %12 = arith.cmpi eq, %10, %11 : vector<8x8xi32>
    %13 = arith.andi %12, %7 : vector<8x8xi1>
    %14 = arith.extui %13 : vector<8x8xi1> to vector<8x8xi32>
    %15 = arith.sitofp %14 : vector<8x8xi32> to vector<8x8xf32>
    %c0_3 = arith.constant 0 : index
    %c0_4 = arith.constant 0 : index
    %16 = vector.load %arg3[%c0_3, %c0_4] : memref<8x32xf32, #tpu.memory_space<vmem>>, vector<8x32xf32>
    %c0_5 = arith.constant 0 : index
    %c0_6 = arith.constant 0 : index
    %17 = vector.load %arg4[%c0_5, %c0_6] : memref<32x8xf32, #tpu.memory_space<vmem>>, vector<32x8xf32>
    %cst = arith.constant dense<0.000000e+00> : vector<8x8xf32>
    %18 = tpu.matmul %16, %17, %cst {dimension_numbers = #tpu.dot_dimension_numbers<[1], [0], [0], [1], [0, 0, 1, 1], [], []>} : vector<8x32xf32>, vector<32x8xf32>, vector<8x8xf32> -> vector<8x8xf32>
    %cst_7 = arith.constant 14.2857141 : f32
    %19 = vector.broadcast %cst_7 : f32 to vector<8x8xf32>
    %20 = arith.mulf %18, %19 : vector<8x8xf32>
    %cst_8 = arith.constant dense<0xFF800000> : vector<8xf32>
    %21 = vector.multi_reduction <maximumf>, %20, %cst_8 [1] : vector<8x8xf32> to vector<8xf32>
    %22 = vector.shape_cast %21 : vector<8xf32> to vector<8x1xf32>
    %23 = vector.broadcast %22 : vector<8x1xf32> to vector<8x8xf32>
    %24 = arith.subf %20, %23 : vector<8x8xf32>
    %25 = math.exp %24 : vector<8x8xf32>
    %cst_9 = arith.constant 0.000000e+00 : f32
    %26 = vector.broadcast %cst_9 : f32 to vector<8x8xf32>
    %27 = arith.select %7, %25, %26 : vector<8x8xi1>, vector<8x8xf32>
    %cst_10 = arith.constant dense<0.000000e+00> : vector<8xf32>
    %28 = vector.multi_reduction <add>, %27, %cst_10 [1] : vector<8x8xf32> to vector<8xf32>
    %29 = vector.shape_cast %28 : vector<8xf32> to vector<8x1xf32>
    %30 = math.log %29 : vector<8x1xf32>
    %31 = arith.addf %22, %30 : vector<8x1xf32>
    %32 = arith.mulf %15, %20 : vector<8x8xf32>
    %cst_11 = arith.constant dense<0.000000e+00> : vector<8xf32>
    %33 = vector.multi_reduction <add>, %32, %cst_11 [1] : vector<8x8xf32> to vector<8xf32>
    %34 = vector.shape_cast %33 : vector<8xf32> to vector<8x1xf32>
    %cst_12 = arith.constant dense<0.000000e+00> : vector<8xf32>
    %35 = vector.multi_reduction <add>, %15, %cst_12 [1] : vector<8x8xf32> to vector<8xf32>
    %36 = vector.shape_cast %35 : vector<8xf32> to vector<8x1xf32>
    %37 = arith.mulf %36, %31 : vector<8x1xf32>
    %38 = arith.subf %34, %37 : vector<8x1xf32>
    %39 = tpu.reciprocal %36 : vector<8x1xf32> -> vector<8x1xf32>
    %cst_13 = arith.constant -1.000000e+00 : f32
    %40 = vector.broadcast %cst_13 : f32 to vector<8x1xf32>
    %41 = arith.mulf %39, %40 : vector<8x1xf32>
    %42 = arith.mulf %38, %41 : vector<8x1xf32>
    %c8_i32_14 = arith.constant 8 : i32
    %43 = vector.broadcast %c8_i32_14 : i32 to vector<8x1xi32>
    %44 = arith.cmpi slt, %3, %43 : vector<8x1xi32>
    %cst_15 = arith.constant 0.000000e+00 : f32
    %45 = vector.broadcast %cst_15 : f32 to vector<8x1xf32>
    %46 = arith.select %44, %42, %45 : vector<8x1xi1>, vector<8x1xf32>
    %cst_16 = arith.constant dense<0.000000e+00> : vector<1xf32>
    %47 = vector.multi_reduction <add>, %46, %cst_16 [0] : vector<8x1xf32> to vector<1xf32>
    %48 = vector.shape_cast %47 : vector<1xf32> to vector<1x1xf32>
    %49 = vector.shape_cast %48 : vector<1x1xf32> to vector<1x1xf32>
    %50 = vector.broadcast %49 : vector<1x1xf32> to vector<8x128xf32>
    %c0_17 = arith.constant 0 : index
    %c0_18 = arith.constant 0 : index
    %51 = vector.load %arg5[%c0_17, %c0_18] : memref<8x128xf32, #tpu.memory_space<vmem>>, vector<8x128xf32>
    tpu.vector_store %arg5[%c0_17, %c0_18], %50 {strides = array<i32>} : memref<8x128xf32, #tpu.memory_space<vmem>>, vector<8x128xf32>,
    return
  }
  func.func @transform_0(%arg0: i32) -> (i32, i32) {
    %c0_i32 = arith.constant 0 : i32
    %c0_i32_0 = arith.constant 0 : i32
    return %arg0, %c0_i32 : i32, i32
  }
  func.func @transform_1(%arg0: i32) -> (i32, i32) {
    %c0_i32 = arith.constant 0 : i32
    %c0_i32_0 = arith.constant 0 : i32
    %c0_i32_1 = arith.constant 0 : i32
    return %c0_i32, %c0_i32_0 : i32, i32
  }
  func.func @transform_2(%arg0: i32) -> (i32, i32) {
    %c0_i32 = arith.constant 0 : i32
    %c0_i32_0 = arith.constant 0 : i32
    return %arg0, %c0_i32 : i32, i32
  }
  func.func @transform_3(%arg0: i32) -> (i32, i32) {
    %c0_i32 = arith.constant 0 : i32
    %c0_i32_0 = arith.constant 0 : i32
    %c0_i32_1 = arith.constant 0 : i32
    return %c0_i32, %c0_i32_0 : i32, i32
  }
  func.func @transform_4(%arg0: i32) -> (i32, i32) {
    %c0_i32 = arith.constant 0 : i32
    %c0_i32_0 = arith.constant 0 : i32
    return %c0_i32, %arg0 : i32, i32
  }
}

module attributes {stable_mosaic.version = 11 : i64} {
  func.func @_supcon_labels_kernel(%arg0: i32, %arg1: memref<8x1xi32, #tpu.memory_space<vmem>>, %arg2: memref<1x8xi32, #tpu.memory_space<vmem>>, %arg3: memref<8x32xf32, #tpu.memory_space<vmem>>, %arg4: memref<32x8xf32, #tpu.memory_space<vmem>>, %arg5: memref<8x128xf32, #tpu.memory_space<vmem>>) attributes {dimension_semantics = [#tpu.dimension_semantics<parallel>], iteration_bounds = array<i64: 1>, scalar_prefetch = 0 : i64, scratch_operands = 0 : i64, tpu.core_type = #tpu.core_type<tc>, window_params = [{transform_indices = @transform_0, window_bounds = array<i64: 8, 1>}, {pipeline_mode = #tpu.pipeline_mode<synchronous>, transform_indices = @transform_1, window_bounds = array<i64: 1, 8>}, {transform_indices = @transform_2, window_bounds = array<i64: 8, 32>}, {pipeline_mode = #tpu.pipeline_mode<synchronous>, transform_indices = @transform_3, window_bounds = array<i64: 32, 8>}, {transform_indices = @transform_4, window_bounds = array<i64: 8, 128>}]} {
    %c8_i32 = arith.constant 8 : i32
    %0 = arith.muli %arg0, %c8_i32 : i32
    %1 = tpu.iota {dimensions = array<i32: 0>} : vector<8x1xi32>
    %2 = vector.broadcast %0 : i32 to vector<8x1xi32>
    %3 = arith.addi %1, %2 : vector<8x1xi32>
    %4 = tpu.iota {dimensions = array<i32: 1>} : vector<1x8xi32>
    %5 = vector.broadcast %3 : vector<8x1xi32> to vector<8x8xi32>
    %6 = vector.broadcast %4 : vector<1x8xi32> to vector<8x8xi32>
    %7 = arith.cmpi ne, %5, %6 : vector<8x8xi32>
    %c0 = arith.constant 0 : index
    %c0_0 = arith.constant 0 : index
    %8 = vector.load %arg1[%c0, %c0_0] : memref<8x1xi32, #tpu.memory_space<vmem>>, vector<8x1xi32>
    %c0_1 = arith.constant 0 : index
    %c0_2 = arith.constant 0 : index
    %9 = vector.load %arg2[%c0_1, %c0_2] : memref<1x8xi32, #tpu.memory_space<vmem>>, vector<1x8xi32>
    %10 = vector.broadcast %8 : vector<8x1xi32> to vector<8x8xi32>
    %11 = vector.broadcast %9 : vector<1x8xi32> to vector<8x8xi32>
    %12 = arith.cmpi eq, %10, %11 : vector<8x8xi32>
    %13 = arith.andi %12, %7 : vector<8x8xi1>
    %14 = arith.extui %13 : vector<8x8xi1> to vector<8x8xi32>
    %15 = arith.sitofp %14 : vector<8x8xi32> to vector<8x8xf32>
    %c0_3 = arith.constant 0 : index
    %c0_4 = arith.constant 0 : index
    %16 = vector.load %arg3[%c0_3, %c0_4] : memref<8x32xf32, #tpu.memory_space<vmem>>, vector<8x32xf32>
    %c0_5 = arith.constant 0 : index
    %c0_6 = arith.constant 0 : index
    %17 = vector.load %arg4[%c0_5, %c0_6] : memref<32x8xf32, #tpu.memory_space<vmem>>, vector<32x8xf32>
    %cst = arith.constant dense<0.000000e+00> : vector<8x8xf32>
    %18 = tpu.matmul %16, %17, %cst {dimension_numbers = #tpu.dot_dimension_numbers<[1], [0], [0], [1], [0, 0, 1, 1], [], []>} : vector<8x32xf32>, vector<32x8xf32>, vector<8x8xf32> -> vector<8x8xf32>
    %cst_7 = arith.constant 14.2857141 : f32
    %19 = vector.broadcast %cst_7 : f32 to vector<8x8xf32>
    %20 = arith.mulf %18, %19 : vector<8x8xf32>
    %cst_8 = arith.constant dense<0xFF800000> : vector<8xf32>
    %21 = vector.multi_reduction <maximumf>, %20, %cst_8 [1] : vector<8x8xf32> to vector<8xf32>
    %22 = vector.shape_cast %21 : vector<8xf32> to vector<8x1xf32>
    %23 = vector.broadcast %22 : vector<8x1xf32> to vector<8x8xf32>
    %24 = arith.subf %20, %23 : vector<8x8xf32>
    %25 = math.exp %24 : vector<8x8xf32>
    %cst_9 = arith.constant 0.000000e+00 : f32
    %26 = vector.broadcast %cst_9 : f32 to vector<8x8xf32>
    %27 = arith.select %7, %25, %26 : vector<8x8xi1>, vector<8x8xf32>
    %cst_10 = arith.constant dense<0.000000e+00> : vector<8xf32>
    %28 = vector.multi_reduction <add>, %27, %cst_10 [1] : vector<8x8xf32> to vector<8xf32>
    %29 = vector.shape_cast %28 : vector<8xf32> to vector<8x1xf32>
    %30 = math.log %29 : vector<8x1xf32>
    %31 = arith.addf %22, %30 : vector<8x1xf32>
    %32 = arith.mulf %15, %20 : vector<8x8xf32>
    %cst_11 = arith.constant dense<0.000000e+00> : vector<8xf32>
    %33 = vector.multi_reduction <add>, %32, %cst_11 [1] : vector<8x8xf32> to vector<8xf32>
    %34 = vector.shape_cast %33 : vector<8xf32> to vector<8x1xf32>
    %cst_12 = arith.constant dense<0.000000e+00> : vector<8xf32>
    %35 = vector.multi_reduction <add>, %15, %cst_12 [1] : vector<8x8xf32> to vector<8xf32>
    %36 = vector.shape_cast %35 : vector<8xf32> to vector<8x1xf32>
    %37 = arith.mulf %36, %31 : vector<8x1xf32>
    %38 = arith.subf %34, %37 : vector<8x1xf32>
    %39 = tpu.reciprocal %36 : vector<8x1xf32> -> vector<8x1xf32>
    %cst_13 = arith.constant -1.000000e+00 : f32
    %40 = vector.broadcast %cst_13 : f32 to vector<8x1xf32>
    %41 = arith.mulf %39, %40 : vector<8x1xf32>
    %42 = arith.mulf %38, %41 : vector<8x1xf32>
    %c8_i32_14 = arith.constant 8 : i32
    %43 = vector.broadcast %c8_i32_14 : i32 to vector<8x1xi32>
    %44 = arith.cmpi slt, %3, %43 : vector<8x1xi32>
    %cst_15 = arith.constant 0.000000e+00 : f32
    %45 = vector.broadcast %cst_15 : f32 to vector<8x1xf32>
    %46 = arith.select %44, %42, %45 : vector<8x1xi1>, vector<8x1xf32>
    %cst_16 = arith.constant dense<0.000000e+00> : vector<1xf32>
    %47 = vector.multi_reduction <add>, %46, %cst_16 [0] : vector<8x1xf32> to vector<1xf32>
    %48 = vector.shape_cast %47 : vector<1xf32> to vector<1x1xf32>
    %49 = vector.shape_cast %48 : vector<1x1xf32> to vector<1x1xf32>
    %50 = vector.broadcast %49 : vector<1x1xf32> to vector<8x128xf32>
    %c0_17 = arith.constant 0 : index
    %c0_18 = arith.constant 0 : index
    %51 = vector.load %arg5[%c0_17, %c0_18] : memref<8x128xf32, #tpu.memory_space<vmem>>, vector<8x128xf32>
    tpu.vector_store %arg5[%c0_17, %c0_18], %50 {strides = array<i32>} : memref<8x128xf32, #tpu.memory_space<vmem>>, vector<8x128xf32>,
    return
  }
  func.func @transform_0(%arg0: i32) -> (i32, i32) {
    %c0_i32 = arith.constant 0 : i32
    %c0_i32_0 = arith.constant 0 : i32
    return %arg0, %c0_i32 : i32, i32
  }
  func.func @transform_1(%arg0: i32) -> (i32, i32) {
    %c0_i32 = arith.constant 0 : i32
    %c0_i32_0 = arith.constant 0 : i32
    %c0_i32_1 = arith.constant 0 : i32
    return %c0_i32, %c0_i32_0 : i32, i32
  }
  func.func @transform_2(%arg0: i32) -> (i32, i32) {
    %c0_i32 = arith.constant 0 : i32
    %c0_i32_0 = arith.constant 0 : i32
    return %arg0, %c0_i32 : i32, i32
  }
  func.func @transform_3(%arg0: i32) -> (i32, i32) {
    %c0_i32 = arith.constant 0 : i32
    %c0_i32_0 = arith.constant 0 : i32
    %c0_i32_1 = arith.constant 0 : i32
    return %c0_i32, %c0_i32_0 : i32, i32
  }
  func.func @transform_4(%arg0: i32) -> (i32, i32) {
    %c0_i32 = arith.constant 0 : i32
    %c0_i32_0 = arith.constant 0 : i32
    return %c0_i32, %arg0 : i32, i32
  }
}

</mosaic_0001>

<llo_original>
// kernel: tpu_custom_call.1
$region0: #{tpu_custom_call.1}
  #allocation0 [shape = 'u32[]', space=smem, size = 0x4, offset = 0x4, fixed_abs, tag = 'smem constant byte address 0x4 - core index']
  #allocation1 [shape = 'u32[144,128]{1,0:T(1,128)}', space=vmem, size = 0x12000, scoped, tag = 'internal scratch']
  %s0 = inlined_call_operand.vmem [shape: s32[8,1], index: 0, kind: input, shape index: {}]
  %s1 = inlined_call_operand.vmem [shape: s32[1,8], index: 1, kind: input, shape index: {}]
  %s2 = inlined_call_operand.vmem [shape: f32[8,32], index: 2, kind: input, shape index: {}]
  %s3 = inlined_call_operand.vmem [shape: f32[32,8], index: 3, kind: input, shape index: {}]
  %s4 = inlined_call_operand.hbm [shape: f32[8,128], index: 4, kind: output, shape index: {}]
  %s5 = sld [smem:[#allocation0]]
  $region26: #{tpu_custom_call.1} parent=0
    _
  %s7 = ssub.s32 1, %s5
  %s8 = scalar_select 0, %s7, %s5
  $region1: #{tpu_custom_call.1} parent=0
    #allocation2 [shape = 'u8[4096]{0}', space=vmem, size = 0x1000, scoped, tag = 'output window, operand 0, single buffered']
    #allocation3 [shape = 's32[1]{0}', space=sflag, size = 0x4, scoped, tag = 'scoped memory for tpu_custom_call.1']
    %9 = vsyncpa [#allocation3], 0
    // Predicated region
    $region2: #{tpu_custom_call.1} parent=1 // pred_check
      _
    $region3: #{tpu_custom_call.1} parent=1 // pred_check_branch
      %11 = sbr.rel (0) target = $region5
    $region4: #{tpu_custom_call.1} parent=1 // pred_region
      _
    $region5: #{tpu_custom_call.1} parent=1 // pred_fallthru
      _
    // Predicated region
    $region6: #{tpu_custom_call.1} parent=1 // pred_check
      _
    $region7: #{tpu_custom_call.1} parent=1 // pred_check_branch
      %13 = sbr.rel (0) target = $region9
    $region8: #{tpu_custom_call.1} parent=1 // pred_region
      _
    $region9: #{tpu_custom_call.1} parent=1 // pred_fallthru
      _
    // Predicated region
    $region10: #{tpu_custom_call.1} parent=1 // pred_check
      _
    $region11: #{tpu_custom_call.1} parent=1 // pred_check_branch
      %15 = sbr.rel (0) target = $region13
    $region12: #{tpu_custom_call.1} parent=1 // pred_region
      _
    $region13: #{tpu_custom_call.1} parent=1 // pred_fallthru
      _
    // Predicated region
    $region14: #{tpu_custom_call.1} parent=1 // pred_check
      _
    $region15: #{tpu_custom_call.1} parent=1 // pred_check_branch
      %17 = sbr.rel (0) target = $region17
    $region16: #{tpu_custom_call.1} parent=1 // pred_region
      _
    $region17: #{tpu_custom_call.1} parent=1 // pred_fallthru
      _
    %s18 = smul.u32 0, 8
    %v19 = vlaneseq
    %v20 = vshrl.u32 %v19, 7
    %v21 = vstv %s18
    %v22 = vadd.s32 %v20, %v21
    %v23 = vlaneseq
    %v24 = vand.u32 %v23, 127
    %vm25 = vcmp.ne.s32.totalorder %v22, %v24
    %v26 = vld [vmem:[%s0] sm:$0xff]
    %v27 = vld [vmem:[%s1] sm:$0x1]
    %28 = vset.pattern.permute.xlu0 0
    %29 = vperm.xlu0 %28, %v26
    %v30 = vpop.permute.xlu0 %29
    %v31 = vlaneseq
    %v32 = vshrl.u32 %v31, 7
    %v33 = vsub.s32 0, %v32
    %v34 = vrot.slane %v27, %v33
    %vm35 = vcmp.eq.s32.totalorder %v30, %v34
    %vm36 = vmand %vm35, %vm25
    %v37 = vsel %vm36, 1, 0
    %v38 = vcvt.s32.f32 %v37
    %v39 = vld [vmem:[%s2] sm:$0xff]
    %v40 = vld [vmem:[%s3] sm:$0xff]
    %v41 = vld [vmem:[%s3 + $0x8] sm:$0xff]
    %v42 = vld [vmem:[%s3 + $0x10] sm:$0xff]
    %v43 = vld [vmem:[%s3 + $0x18] sm:$0xff]
    %vm44 = vcmask 261120
    %v46 = vsel %vm44, %v39, 0
    %48 = vmatprep.subr.mxu0 0.0
    %49 = vmatpush1.msra.mxu0 %v40
    %50 = vmatprep.subr.mxu0 0.0
    %51 = vmatpush1.msra.mxu0 %v41
    %52 = vmatprep.subr.mxu0 0.0
    %53 = vmatpush1.msra.mxu0 %v42
    %54 = vmatprep.subr.mxu0 0.0
    %55 = vmatpush1.msra.mxu0 %v43
    %56 = vmatprep.subr.mxu0 0.0
    %57 = vmatpush1.msra.mxu0 0.0
    %58 = vmatprep.subr.mxu0 0.0
    %59 = vmatpush1.msra.mxu0 0.0
    %60 = vmatprep.subr.mxu0 0.0
    %61 = vmatpush1.msra.mxu0 0.0
    %62 = vmatprep.subr.mxu0 0.0
    %63 = vmatpush1.msra.mxu0 0.0
    %64 = vmatprep.subr.mxu0 0.0
    %65 = vmatpush1.msra.mxu0 0.0
    %66 = vmatprep.subr.mxu0 0.0
    %67 = vmatpush1.msra.mxu0 0.0
    %68 = vmatprep.subr.mxu0 0.0
    %69 = vmatpush1.msra.mxu0 0.0
    %70 = vmatprep.subr.mxu0 0.0
    %71 = vmatpush1.msra.mxu0 0.0
    %72 = vmatprep.subr.mxu0 0.0
    %73 = vmatpush1.msra.mxu0 0.0
    %74 = vmatprep.subr.mxu0 0.0
    %75 = vmatpush1.msra.mxu0 0.0
    %76 = vmatprep.subr.mxu0 0.0
    %77 = vmatpush1.msra.mxu0 0.0
    %78 = vmatprep.subr.mxu0 0.0
    %79 = vmatpush1.msra.mxu0 0.0
    %80 = vmatprep.subr.mxu0 0.0
    %81 = vmatpush1.msra.mxu0 0.0
    %82 = vmatprep.subr.mxu0 0.0
    %83 = vmatpush1.msra.mxu0 0.0
    %84 = vmatprep.subr.mxu0 0.0
    %85 = vmatpush1.msra.mxu0 0.0
    %86 = vmatprep.subr.mxu0 0.0
    %87 = vmatpush1.msra.mxu0 0.0
    %88 = vmatprep.subr.mxu0 0.0
    %89 = vmatpush1.msra.mxu0 0.0
    %90 = vmatprep.subr.mxu0 0.0
    %91 = vmatpush1.msra.mxu0 0.0
    %92 = vmatprep.subr.mxu0 0.0
    %93 = vmatpush1.msra.mxu0 0.0
    %94 = vmatprep.subr.mxu0 0.0
    %95 = vmatpush1.msra.mxu0 0.0
    %96 = vmatprep.subr.mxu0 0.0
    %97 = vmatpush1.msra.mxu0 0.0
    %98 = vmatprep.subr.mxu0 0.0
    %99 = vmatpush1.msra.mxu0 0.0
    %100 = vmatprep.subr.mxu0 0.0
    %101 = vmatpush1.msra.mxu0 0.0
    %102 = vmatprep.subr.mxu0 0.0
    %103 = vmatpush1.msra.mxu0 0.0
    %104 = vmatprep.subr.mxu0 0.0
    %105 = vmatpush1.msra.mxu0 0.0
    %106 = vmatprep.subr.mxu0 0.0
    %107 = vmatpush1.msra.mxu0 0.0
    %108 = vmatprep.subr.mxu0 0.0
    %109 = vmatpush1.msra.mxu0 0.0
    %110 = vmatprep.subr.mxu0 0.0
    %111 = vmatpush1.msra.mxu0 0.0
    %112 = vmatprep.mubr.f32.mxu0 0.0
    %113 = vmatmul.mubr.f32.gmra.mrb[0].mxu0 %v46
    %v114 = vpop.f32.mrb[0].mxu0
    %v115 = vadd.f32 0.0, %v114
    %v116 = vpop.f32.mrb[0].mxu0
    %117 = vdwg.mxu0
    %v118 = vmul.f32 %v115, 14.285714
    %vm119 = vcmask 64512
    %v120 = vsel %vm119, %v118, -inf
    %121 = vmax.xlane.f32.xlu0 %v120
    %v122 = vpop.xlane.xlu0 %121
    %v123 = vsub.f32 %v118, %v122
    %v124 = vmul.f32 %v123, 1.442695
    %v125 = vpow.pop %v124
    %v126 = vsel %vm25, %v125, 0.0
    %v127 = vsel %vm119, %v126, 0.0
    %128 = vadd.xlane.f32.xlu0 %v127
    %v129 = vpop.xlane.xlu0 %128
    %v130 = vlog2.pop %v129
    %v131 = vmul.f32 %v130, 0.6931472
    %v132 = vadd.f32 %v122, %v131
    %v133 = vmul.f32 %v38, %v118
    %v134 = vsel %vm119, %v133, 0.0
    %135 = vadd.xlane.f32.xlu0 %v134
    %v136 = vpop.xlane.xlu0 %135
    %v137 = vsel %vm119, %v38, 0.0
    %138 = vadd.xlane.f32.xlu0 %v137
    %v139 = vpop.xlane.xlu0 %138
    %v140 = vmul.f32 %v139, %v132
    %v141 = vsub.f32 %v136, %v140
    %v142 = vrcp.pop %v139
    %v143 = vmul.f32 %v142, -1.0
    %v144 = vmul.f32 %v141, %v143
    %vm145 = vcmp.lt.s32.totalorder %v22, 8
    %v146 = vsel %vm145, %v144, 0.0
    %v147 = vrot.slane %v146, 4
    %v148 = vadd.f32 %v146, %v147
    %v149 = vrot.slane %v148, 2
    %v150 = vadd.f32 %v148, %v149
    %v151 = vrot.slane %v150, 1
    %v152 = vadd.f32 %v150, %v151
    %153 = vst [vmem:[#allocation2] sm:$0xff] %v152
    // Predicated region
    $region18: #{tpu_custom_call.1} parent=1 // pred_check
      _
    $region19: #{tpu_custom_call.1} parent=1 // pred_check_branch
      %155 = sbr.rel (0) target = $region21
    $region20: #{tpu_custom_call.1} parent=1 // pred_region
      %s157 = ssub.s32 128, 128
      %158 = vsyncadd [#allocation3], %s157
      %s160 = sshll.u32 [#allocation2], 4
      %s161 = int_to_ptr.vmem [resolvable:$true] %s160
      %163 = dma.vmem_to_hbm [thread:$0]  %s161, 128, %s4, [#allocation3]
    $region21: #{tpu_custom_call.1} parent=1 // pred_fallthru
      _
    // Predicated region
    $region22: #{tpu_custom_call.1} parent=1 // pred_check
      _
    $region23: #{tpu_custom_call.1} parent=1 // pred_check_branch
      %165 = sbr.rel (0) target = $region25
    $region24: #{tpu_custom_call.1} parent=1 // pred_region
      %166 = dma.done [#allocation3], 128
    $region25: #{tpu_custom_call.1} parent=1 // pred_fallthru
      _
    %167 = vsyncpa [#allocation3], 1

// kernel: tpu_custom_call.1
$region0: #{tpu_custom_call.1}
  #allocation0 [shape = 'u32[]', space=smem, size = 0x4, offset = 0x4, fixed_abs, tag = 'smem constant byte address 0x4 - core index']
  #allocation1 [shape = 'u32[144,128]{1,0:T(1,128)}', space=vmem, size = 0x12000, scoped, tag = 'internal scratch']
  %s0 = inlined_call_operand.vmem [shape: s32[8,1], index: 0, kind: input, shape index: {}]
  %s1 = inlined_call_operand.vmem [shape: s32[1,8], index: 1, kind: input, shape index: {}]
  %s2 = inlined_call_operand.vmem [shape: f32[8,32], index: 2, kind: input, shape index: {}]
  %s3 = inlined_call_operand.vmem [shape: f32[32,8], index: 3, kind: input, shape index: {}]
  %s4 = inlined_call_operand.hbm [shape: f32[8,128], index: 4, kind: output, shape index: {}]
  %s5 = sld [smem:[#allocation0]]
  $region26: #{tpu_custom_call.1} parent=0
    _
  %s7 = ssub.s32 1, %s5
  %s8 = scalar_select 0, %s7, %s5
  $region1: #{tpu_custom_call.1} parent=0
    #allocation2 [shape = 'u8[4096]{0}', space=vmem, size = 0x1000, scoped, tag = 'output window, operand 0, single buffered']
    #allocation3 [shape = 's32[1]{0}', space=sflag, size = 0x4, scoped, tag = 'scoped memory for tpu_custom_call.1']
    %9 = vsyncpa [#allocation3], 0
    // Predicated region
    $region2: #{tpu_custom_call.1} parent=1 // pred_check
      _
    $region3: #{tpu_custom_call.1} parent=1 // pred_check_branch
      %11 = sbr.rel (0) target = $region5
    $region4: #{tpu_custom_call.1} parent=1 // pred_region
      _
    $region5: #{tpu_custom_call.1} parent=1 // pred_fallthru
      _
    // Predicated region
    $region6: #{tpu_custom_call.1} parent=1 // pred_check
      _
    $region7: #{tpu_custom_call.1} parent=1 // pred_check_branch
      %13 = sbr.rel (0) target = $region9
    $region8: #{tpu_custom_call.1} parent=1 // pred_region
      _
    $region9: #{tpu_custom_call.1} parent=1 // pred_fallthru
      _
    // Predicated region
    $region10: #{tpu_custom_call.1} parent=1 // pred_check
      _
    $region11: #{tpu_custom_call.1} parent=1 // pred_check_branch
      %15 = sbr.rel (0) target = $region13
    $region12: #{tpu_custom_call.1} parent=1 // pred_region
      _
    $region13: #{tpu_custom_call.1} parent=1 // pred_fallthru
      _
    // Predicated region
    $region14: #{tpu_custom_call.1} parent=1 // pred_check
      _
    $region15: #{tpu_custom_call.1} parent=1 // pred_check_branch
      %17 = sbr.rel (0) target = $region17
    $region16: #{tpu_custom_call.1} parent=1 // pred_region
      _
    $region17: #{tpu_custom_call.1} parent=1 // pred_fallthru
      _
    %s18 = smul.u32 0, 8
    %v19 = vlaneseq
    %v20 = vshrl.u32 %v19, 7
    %v21 = vstv %s18
    %v22 = vadd.s32 %v20, %v21
    %v23 = vlaneseq
    %v24 = vand.u32 %v23, 127
    %vm25 = vcmp.ne.s32.totalorder %v22, %v24
    %v26 = vld [vmem:[%s0] sm:$0xff]
    %v27 = vld [vmem:[%s1] sm:$0x1]
    %28 = vset.pattern.permute.xlu0 0
    %29 = vperm.xlu0 %28, %v26
    %v30 = vpop.permute.xlu0 %29
    %v31 = vlaneseq
    %v32 = vshrl.u32 %v31, 7
    %v33 = vsub.s32 0, %v32
    %v34 = vrot.slane %v27, %v33
    %vm35 = vcmp.eq.s32.totalorder %v30, %v34
    %vm36 = vmand %vm35, %vm25
    %v37 = vsel %vm36, 1, 0
    %v38 = vcvt.s32.f32 %v37
    %v39 = vld [vmem:[%s2] sm:$0xff]
    %v40 = vld [vmem:[%s3] sm:$0xff]
    %v41 = vld [vmem:[%s3 + $0x8] sm:$0xff]
    %v42 = vld [vmem:[%s3 + $0x10] sm:$0xff]
    %v43 = vld [vmem:[%s3 + $0x18] sm:$0xff]
    %vm44 = vcmask 261120
    %v46 = vsel %vm44, %v39, 0
    %48 = vmatprep.subr.mxu0 0.0
    %49 = vmatpush1.msra.mxu0 %v40
    %50 = vmatprep.subr.mxu0 0.0
    %51 = vmatpush1.msra.mxu0 %v41
    %52 = vmatprep.subr.mxu0 0.0
    %53 = vmatpush1.msra.mxu0 %v42
    %54 = vmatprep.subr.mxu0 0.0
    %55 = vmatpush1.msra.mxu0 %v43
    %56 = vmatprep.subr.mxu0 0.0
    %57 = vmatpush1.msra.mxu0 0.0
    %58 = vmatprep.subr.mxu0 0.0
    %59 = vmatpush1.msra.mxu0 0.0
    %60 = vmatprep.subr.mxu0 0.0
    %61 = vmatpush1.msra.mxu0 0.0
    %62 = vmatprep.subr.mxu0 0.0
    %63 = vmatpush1.msra.mxu0 0.0
    %64 = vmatprep.subr.mxu0 0.0
    %65 = vmatpush1.msra.mxu0 0.0
    %66 = vmatprep.subr.mxu0 0.0
    %67 = vmatpush1.msra.mxu0 0.0
    %68 = vmatprep.subr.mxu0 0.0
    %69 = vmatpush1.msra.mxu0 0.0
    %70 = vmatprep.subr.mxu0 0.0
    %71 = vmatpush1.msra.mxu0 0.0
    %72 = vmatprep.subr.mxu0 0.0
    %73 = vmatpush1.msra.mxu0 0.0
    %74 = vmatprep.subr.mxu0 0.0
    %75 = vmatpush1.msra.mxu0 0.0
    %76 = vmatprep.subr.mxu0 0.0
    %77 = vmatpush1.msra.mxu0 0.0
    %78 = vmatprep.subr.mxu0 0.0
    %79 = vmatpush1.msra.mxu0 0.0
    %80 = vmatprep.subr.mxu0 0.0
    %81 = vmatpush1.msra.mxu0 0.0
    %82 = vmatprep.subr.mxu0 0.0
    %83 = vmatpush1.msra.mxu0 0.0
    %84 = vmatprep.subr.mxu0 0.0
    %85 = vmatpush1.msra.mxu0 0.0
    %86 = vmatprep.subr.mxu0 0.0
    %87 = vmatpush1.msra.mxu0 0.0
    %88 = vmatprep.subr.mxu0 0.0
    %89 = vmatpush1.msra.mxu0 0.0
    %90 = vmatprep.subr.mxu0 0.0
    %91 = vmatpush1.msra.mxu0 0.0
    %92 = vmatprep.subr.mxu0 0.0
    %93 = vmatpush1.msra.mxu0 0.0
    %94 = vmatprep.subr.mxu0 0.0
    %95 = vmatpush1.msra.mxu0 0.0
    %96 = vmatprep.subr.mxu0 0.0
    %97 = vmatpush1.msra.mxu0 0.0
    %98 = vmatprep.subr.mxu0 0.0
    %99 = vmatpush1.msra.mxu0 0.0
    %100 = vmatprep.subr.mxu0 0.0
    %101 = vmatpush1.msra.mxu0 0.0
    %102 = vmatprep.subr.mxu0 0.0
    %103 = vmatpush1.msra.mxu0 0.0
    %104 = vmatprep.subr.mxu0 0.0
    %105 = vmatpush1.msra.mxu0 0.0
    %106 = vmatprep.subr.mxu0 0.0
    %107 = vmatpush1.msra.mxu0 0.0
    %108 = vmatprep.subr.mxu0 0.0
    %109 = vmatpush1.msra.mxu0 0.0
    %110 = vmatprep.subr.mxu0 0.0
    %111 = vmatpush1.msra.mxu0 0.0
    %112 = vmatprep.mubr.f32.mxu0 0.0
    %113 = vmatmul.mubr.f32.gmra.mrb[0].mxu0 %v46
    %v114 = vpop.f32.mrb[0].mxu0
    %v115 = vadd.f32 0.0, %v114
    %v116 = vpop.f32.mrb[0].mxu0
    %117 = vdwg.mxu0
    %v118 = vmul.f32 %v115, 14.285714
    %vm119 = vcmask 64512
    %v120 = vsel %vm119, %v118, -inf
    %121 = vmax.xlane.f32.xlu0 %v120
    %v122 = vpop.xlane.xlu0 %121
    %v123 = vsub.f32 %v118, %v122
    %v124 = vmul.f32 %v123, 1.442695
    %v125 = vpow.pop %v124
    %v126 = vsel %vm25, %v125, 0.0
    %v127 = vsel %vm119, %v126, 0.0
    %128 = vadd.xlane.f32.xlu0 %v127
    %v129 = vpop.xlane.xlu0 %128
    %v130 = vlog2.pop %v129
    %v131 = vmul.f32 %v130, 0.6931472
    %v132 = vadd.f32 %v122, %v131
    %v133 = vmul.f32 %v38, %v118
    %v134 = vsel %vm119, %v133, 0.0
    %135 = vadd.xlane.f32.xlu0 %v134
    %v136 = vpop.xlane.xlu0 %135
    %v137 = vsel %vm119, %v38, 0.0
    %138 = vadd.xlane.f32.xlu0 %v137
    %v139 = vpop.xlane.xlu0 %138
    %v140 = vmul.f32 %v139, %v132
    %v141 = vsub.f32 %v136, %v140
    %v142 = vrcp.pop %v139
    %v143 = vmul.f32 %v142, -1.0
    %v144 = vmul.f32 %v141, %v143
    %vm145 = vcmp.lt.s32.totalorder %v22, 8
    %v146 = vsel %vm145, %v144, 0.0
    %v147 = vrot.slane %v146, 4
    %v148 = vadd.f32 %v146, %v147
    %v149 = vrot.slane %v148, 2
    %v150 = vadd.f32 %v148, %v149
    %v151 = vrot.slane %v150, 1
    %v152 = vadd.f32 %v150, %v151
    %153 = vst [vmem:[#allocation2] sm:$0xff] %v152
    // Predicated region
    $region18: #{tpu_custom_call.1} parent=1 // pred_check
      _
    $region19: #{tpu_custom_call.1} parent=1 // pred_check_branch
      %155 = sbr.rel (0) target = $region21
    $region20: #{tpu_custom_call.1} parent=1 // pred_region
      %s157 = ssub.s32 128, 128
      %158 = vsyncadd [#allocation3], %s157
      %s160 = sshll.u32 [#allocation2], 4
      %s161 = int_to_ptr.vmem [resolvable:$true] %s160
      %163 = dma.vmem_to_hbm [thread:$0]  %s161, 128, %s4, [#allocation3]
    $region21: #{tpu_custom_call.1} parent=1 // pred_fallthru
      _
    // Predicated region
    $region22: #{tpu_custom_call.1} parent=1 // pred_check
      _
    $region23: #{tpu_custom_call.1} parent=1 // pred_check_branch
      %165 = sbr.rel (0) target = $region25
    $region24: #{tpu_custom_call.1} parent=1 // pred_region
      %166 = dma.done [#allocation3], 128
    $region25: #{tpu_custom_call.1} parent=1 // pred_fallthru
      _
    %167 = vsyncpa [#allocation3], 1

</llo_original>
